<compile_context>
chip_gen: v5e
topology: v5e:2x2
jax: 0.10.0
libtpu: 0.0.40
codegen_flags: <defaults>
</compile_context>

<pallas_src>
import jax
import jax.numpy as jnp
from jax.experimental import pallas as pl
from jax.experimental.pallas import tpu as pltpu


def _scaling_kernel(inv_ref, bias_ref, x_ref, o_ref):
    # inv_ref / bias_ref: (block_rows, 1) per-row affine params (VMEM).
    # x_ref / o_ref: (block_rows, block_cols) lane-dense tiles (VMEM).
    o_ref[...] = x_ref[...] * inv_ref[...] + bias_ref[...]


def _round_up(v, m):
    return ((v + m - 1) // m) * m


def scaling_layer(x, shift, scale, *, target_block_bytes=1 << 20):
    """Computes (x - shift[None,:,None,None]) / scale[None,:,None,None].

    x: (N, C, H, W) float32; shift/scale: (C,) float32.
    """
    n, c, h, w = x.shape
    assert shift.shape == (c,) and scale.shape == (c,)
    r = n * c           # one row per (image, channel)
    l = h * w           # flattened spatial dims -> lane axis

    x2 = x.reshape(r, l)

    # Fold the divide into a multiply-add: out = x * inv_scale + bias.
    inv_scale = (1.0 / scale).astype(x.dtype)
    bias = (-shift * inv_scale).astype(x.dtype)
    inv_rows = jnp.broadcast_to(inv_scale[None, :], (n, c)).reshape(r, 1)
    bias_rows = jnp.broadcast_to(bias[None, :], (n, c)).reshape(r, 1)

    # Fixed block sizes: rows full-extent if small (else multiples of 8),
    # columns a multiple of 128 sized to ~target_block_bytes of x per block.
    block_rows = r if r <= 8 else 8
    itemsize = jnp.dtype(x.dtype).itemsize
    max_cols = max(128, (target_block_bytes // (block_rows * itemsize)) // 128 * 128)
    block_cols = min(max_cols, _round_up(l, 128))

    grid = (pl.cdiv(r, block_rows), pl.cdiv(l, block_cols))

    out2 = pl.pallas_call(
        _scaling_kernel,
        out_shape=jax.ShapeDtypeStruct((r, l), x.dtype),
        grid=grid,
        in_specs=[
            pl.BlockSpec((block_rows, 1), lambda i, j: (i, 0)),           # inv_scale
            pl.BlockSpec((block_rows, 1), lambda i, j: (i, 0)),           # bias
            pl.BlockSpec((block_rows, block_cols), lambda i, j: (i, j)),  # x
        ],
        out_specs=pl.BlockSpec((block_rows, block_cols), lambda i, j: (i, j)),
        compiler_params=pltpu.CompilerParams(
            dimension_semantics=("parallel", "parallel"),
            vmem_limit_bytes=32 * 1024 * 1024,
        ),
    )(inv_rows, bias_rows, x2)

    return out2.reshape(n, c, h, w)


if __name__ == "__main__":
    # Deterministic buffers straight from the module's __init__.
    shift = jnp.array([-0.030, -0.088, -0.188], dtype=jnp.float32)
    scale = jnp.array([0.458, 0.448, 0.450], dtype=jnp.float32)

    key = jax.random.PRNGKey(0)
    x = jax.random.normal(key, (2, 3, 16, 16), dtype=jnp.float32)  # NCHW, C=3

    out = scaling_layer(x, shift, scale)
    out = jax.block_until_ready(out)

    # Reference check against plain JAX broadcast semantics (divide form).
    ref = (x - shift[None, :, None, None]) / scale[None, :, None, None]
    assert out.shape == x.shape and out.dtype == x.dtype
    # multiply-by-reciprocal may differ from divide by ~1 ulp
    assert jnp.allclose(out, ref, atol=1e-5, rtol=1e-5)

    print("KERNEL_OK")
</pallas_src>

<mosaic_0001>
module attributes {stable_mosaic.version = 11 : i64} {
  func.func @_scaling_kernel(%arg0: i32, %arg1: i32, %arg2: memref<6x1xf32, #tpu.memory_space<vmem>>, %arg3: memref<6x1xf32, #tpu.memory_space<vmem>>, %arg4: memref<6x256xf32, #tpu.memory_space<vmem>>, %arg5: memref<6x256xf32, #tpu.memory_space<vmem>>) attributes {dimension_semantics = [#tpu.dimension_semantics<parallel>, #tpu.dimension_semantics<parallel>], iteration_bounds = array<i64: 1, 1>, scalar_prefetch = 0 : i64, scratch_operands = 0 : i64, tpu.core_type = #tpu.core_type<tc>, window_params = [{transform_indices = @transform_0, window_bounds = array<i64: 6, 1>}, {transform_indices = @transform_1, window_bounds = array<i64: 6, 1>}, {transform_indices = @transform_2, window_bounds = array<i64: 6, 256>}, {transform_indices = @transform_3, window_bounds = array<i64: 6, 256>}]} {
    %c0 = arith.constant 0 : index
    %c0_0 = arith.constant 0 : index
    %0 = vector.load %arg4[%c0, %c0_0] : memref<6x256xf32, #tpu.memory_space<vmem>>, vector<6x256xf32>
    %c0_1 = arith.constant 0 : index
    %c0_2 = arith.constant 0 : index
    %1 = vector.load %arg2[%c0_1, %c0_2] : memref<6x1xf32, #tpu.memory_space<vmem>>, vector<6x1xf32>
    %2 = vector.broadcast %1 : vector<6x1xf32> to vector<6x256xf32>
    %3 = arith.mulf %0, %2 : vector<6x256xf32>
    %c0_3 = arith.constant 0 : index
    %c0_4 = arith.constant 0 : index
    %4 = vector.load %arg3[%c0_3, %c0_4] : memref<6x1xf32, #tpu.memory_space<vmem>>, vector<6x1xf32>
    %5 = vector.broadcast %4 : vector<6x1xf32> to vector<6x256xf32>
    %6 = arith.addf %3, %5 : vector<6x256xf32>
    %c0_5 = arith.constant 0 : index
    %c0_6 = arith.constant 0 : index
    %7 = vector.load %arg5[%c0_5, %c0_6] : memref<6x256xf32, #tpu.memory_space<vmem>>, vector<6x256xf32>
    tpu.vector_store %arg5[%c0_5, %c0_6], %6 {strides = array<i32>} : memref<6x256xf32, #tpu.memory_space<vmem>>, vector<6x256xf32>,
    return
  }
  func.func @transform_0(%arg0: i32, %arg1: i32) -> (i32, i32) {
    %c0_i32 = arith.constant 0 : i32
    %c0_i32_0 = arith.constant 0 : i32
    return %arg0, %c0_i32 : i32, i32
  }
  func.func @transform_1(%arg0: i32, %arg1: i32) -> (i32, i32) {
    %c0_i32 = arith.constant 0 : i32
    %c0_i32_0 = arith.constant 0 : i32
    return %arg0, %c0_i32 : i32, i32
  }
  func.func @transform_2(%arg0: i32, %arg1: i32) -> (i32, i32) {
    %c0_i32 = arith.constant 0 : i32
    return %arg0, %arg1 : i32, i32
  }
  func.func @transform_3(%arg0: i32, %arg1: i32) -> (i32, i32) {
    %c0_i32 = arith.constant 0 : i32
    return %arg0, %arg1 : i32, i32
  }
}

</mosaic_0001>

<llo_original>
// kernel: tpu_custom_call.1
$region0: #{tpu_custom_call.1}
  #allocation0 [shape = 'u32[]', space=smem, size = 0x4, offset = 0x4, fixed_abs, tag = 'smem constant byte address 0x4 - core index']
  #allocation1 [shape = 'u32[72,128]{1,0:T(1,128)}', space=vmem, size = 0x9000, scoped, tag = 'internal scratch']
  %s0 = inlined_call_operand.vmem [shape: f32[6,1], index: 0, kind: input, shape index: {}]
  %s1 = inlined_call_operand.vmem [shape: f32[6,1], index: 1, kind: input, shape index: {}]
  %s2 = inlined_call_operand.vmem [shape: f32[6,256], index: 2, kind: input, shape index: {}]
  %s3 = inlined_call_operand.hbm [shape: f32[6,256], index: 3, kind: output, shape index: {}]
  %s4 = sld [smem:[#allocation0]]
  $region22: #{tpu_custom_call.1} parent=0
    _
  %s6 = ssub.s32 1, %s4
  %s7 = scalar_select 0, %s6, %s4
  $region1: #{tpu_custom_call.1} parent=0
    #allocation2 [shape = 'u8[8192]{0}', space=vmem, size = 0x2000, scoped, tag = 'output window, operand 0, single buffered']
    #allocation3 [shape = 's32[1]{0}', space=sflag, size = 0x4, scoped, tag = 'scoped memory for tpu_custom_call.1']
    %8 = vsyncpa [#allocation3], 0
    // Predicated region
    $region2: #{tpu_custom_call.1} parent=1 // pred_check
      _
    $region3: #{tpu_custom_call.1} parent=1 // pred_check_branch
      %10 = sbr.rel (0) target = $region5
    $region4: #{tpu_custom_call.1} parent=1 // pred_region
      _
    $region5: #{tpu_custom_call.1} parent=1 // pred_fallthru
      _
    // Predicated region
    $region6: #{tpu_custom_call.1} parent=1 // pred_check
      _
    $region7: #{tpu_custom_call.1} parent=1 // pred_check_branch
      %12 = sbr.rel (0) target = $region9
    $region8: #{tpu_custom_call.1} parent=1 // pred_region
      _
    $region9: #{tpu_custom_call.1} parent=1 // pred_fallthru
      _
    // Predicated region
    $region10: #{tpu_custom_call.1} parent=1 // pred_check
      _
    $region11: #{tpu_custom_call.1} parent=1 // pred_check_branch
      %14 = sbr.rel (0) target = $region13
    $region12: #{tpu_custom_call.1} parent=1 // pred_region
      _
    $region13: #{tpu_custom_call.1} parent=1 // pred_fallthru
      _
    %v15 = vld [vmem:[%s2] sm:$0x3f]
    %v16 = vld [vmem:[%s2 + $0x8] sm:$0x3f]
    %v17 = vld [vmem:[%s0] sm:$0x3f]
    %19 = vset.pattern.permute.xlu0 0
    %20 = vperm.xlu0 %19, %v17
    %v21 = vpop.permute.xlu0 %20
    %v23 = vmul.f32 %v15, %v21
    %v24 = vmul.f32 %v16, %v21
    %v25 = vld [vmem:[%s1] sm:$0x3f]
    %27 = vset.pattern.permute.xlu0 0
    %28 = vperm.xlu0 %27, %v25
    %v29 = vpop.permute.xlu0 %28
    %v31 = vadd.f32 %v23, %v29
    %v32 = vadd.f32 %v24, %v29
    %33 = vst [vmem:[#allocation2] sm:$0x3f] %v31
    %34 = vst [vmem:[#allocation2 + $0x8] sm:$0x3f] %v32
    // Predicated region
    $region14: #{tpu_custom_call.1} parent=1 // pred_check
      _
    $region15: #{tpu_custom_call.1} parent=1 // pred_check_branch
      %36 = sbr.rel (0) target = $region17
    $region16: #{tpu_custom_call.1} parent=1 // pred_region
      %38 = vsyncadd [#allocation3], 0
      %s40 = sshll.u32 [#allocation2], 4
      %s41 = int_to_ptr.vmem [resolvable:$true] %s40
      %s42 = sshll.u32 %s3, 4
      %s43 = int_to_ptr.hbm [resolvable:$true] %s42
      %45 = dma.vmem_to_hbm [thread:$0]  %s41, 256, %s43, [#allocation3]
    $region17: #{tpu_custom_call.1} parent=1 // pred_fallthru
      _
    // Predicated region
    $region18: #{tpu_custom_call.1} parent=1 // pred_check
      _
    $region19: #{tpu_custom_call.1} parent=1 // pred_check_branch
      %47 = sbr.rel (0) target = $region21
    $region20: #{tpu_custom_call.1} parent=1 // pred_region
      %49 = dma.done [#allocation3], 256
    $region21: #{tpu_custom_call.1} parent=1 // pred_fallthru
      _
    %50 = vsyncpa [#allocation3], 1

</llo_original>
